<compile_context>
chip_gen: v7x
topology: tpu7x:2x2x1
jax: 0.10.0
libtpu: 0.0.40
codegen_flags: <defaults>
</compile_context>

<pallas_src>
import functools

import numpy as np
import jax
import jax.numpy as jnp
from jax import lax
from jax.experimental import pallas as pl
from jax.experimental.pallas import tpu as pltpu

_LANES = 128


def _round_up(x, m):
    return ((x + m - 1) // m) * m


# ------------------------- kernel 1: packed voxel keys ------------------------


def _voxel_key_kernel(xyz_ref, key_ref, *, pc_min, vsize, gsize):
    """xyz_ref: (3, R, 128) f32 block (rows of x / y / z); key_ref: (R, 128) i32.

    key = ((cz * ny) + cy) * nx + cx if the point is inside the range, else -1.
    """
    nx, ny, nz = gsize
    # Division (not pre-inverted reciprocal) to stay closer to mmcv's semantics.
    fx = jnp.floor((xyz_ref[0] - pc_min[0]) / vsize[0])
    fy = jnp.floor((xyz_ref[1] - pc_min[1]) / vsize[1])
    fz = jnp.floor((xyz_ref[2] - pc_min[2]) / vsize[2])
    valid = ((fx >= 0.0) & (fx < nx)
             & (fy >= 0.0) & (fy < ny)
             & (fz >= 0.0) & (fz < nz))
    cx = fx.astype(jnp.int32)
    cy = fy.astype(jnp.int32)
    cz = fz.astype(jnp.int32)
    key = (cz * ny + cy) * nx + cx
    key_ref[...] = jnp.where(valid, key, -1)


@functools.lru_cache(maxsize=None)
def _build_voxel_key_call(rows, block_rows, pc_min, vsize, gsize):
    kern = functools.partial(_voxel_key_kernel,
                             pc_min=pc_min, vsize=vsize, gsize=gsize)
    call = pl.pallas_call(
        kern,
        out_shape=jax.ShapeDtypeStruct((rows, _LANES), jnp.int32),
        grid=(rows // block_rows,),
        in_specs=[pl.BlockSpec((3, block_rows, _LANES), lambda i: (0, i, 0))],
        out_specs=pl.BlockSpec((block_rows, _LANES), lambda i: (i, 0)),
        compiler_params=pltpu.CompilerParams(
            dimension_semantics=("parallel",)),
    )
    return jax.jit(call)


# ------------------------- kernel 2: pillar gather ----------------------------


@functools.lru_cache(maxsize=None)
def _build_pillar_gather_call(n_pts_pad, n_feats, mv_pad, mnp, pillar_block):
    """Gather point rows into a lane-dense (mv_pad, mnp * n_feats) pillar table.

    idx_ref : (mv_pad * mnp,) i32 in SMEM (scalar prefetch); empty slots point at a
              guaranteed-zero padded row of pts, so no in-kernel masking is needed.
    pts_ref : (n_pts_pad, n_feats) f32 in VMEM (whole cloud, block index constant).
    out_ref : (pillar_block, mnp * n_feats) f32 — one block of pillars per step.
    """

    def kernel(idx_ref, pts_ref, out_ref):
        blk = pl.program_id(0)

        def per_pillar(p, carry):
            base = (blk * pillar_block + p) * mnp
            for s in range(mnp):  # small static unroll over slots
                i = idx_ref[base + s]
                out_ref[pl.ds(p, 1), pl.ds(s * n_feats, n_feats)] = (
                    pts_ref[pl.ds(i, 1), :])
            return carry

        lax.fori_loop(0, pillar_block, per_pillar, 0)

    grid_spec = pltpu.PrefetchScalarGridSpec(
        num_scalar_prefetch=1,
        grid=(mv_pad // pillar_block,),
        in_specs=[pl.BlockSpec((n_pts_pad, n_feats), lambda b, idx: (0, 0))],
        out_specs=pl.BlockSpec((pillar_block, mnp * n_feats),
                               lambda b, idx: (b, 0)),
    )
    call = pl.pallas_call(
        kernel,
        out_shape=jax.ShapeDtypeStruct((mv_pad, mnp * n_feats), jnp.float32),
        grid_spec=grid_spec,
        compiler_params=pltpu.CompilerParams(
            dimension_semantics=("parallel",)),
    )
    return jax.jit(call)


# ------------------------------- PillarLayer ----------------------------------


class PillarLayerPallas:
    """Reproduces PillarLayer.forward (hard voxelization, mmcv semantics)."""

    _MAX_KEY_BLOCK_ROWS = 256   # 256 * 128 = 32K points per voxel-key grid step
    _PTS_PAD = 512              # bucket point counts -> one compile per bucket

    def __init__(self, voxel_size, point_cloud_range, max_num_points, max_voxels):
        self.voxel_size = tuple(float(v) for v in voxel_size)
        self.pc_range = tuple(float(v) for v in point_cloud_range)
        self.max_num_points = int(max_num_points)
        self.max_voxels = int(max_voxels)
        gs = np.round((np.asarray(self.pc_range[3:6])
                       - np.asarray(self.pc_range[:3]))
                      / np.asarray(self.voxel_size)).astype(np.int64)
        self.grid_size = (int(gs[0]), int(gs[1]), int(gs[2]))  # (nx, ny, nz)
        assert (self.grid_size[0] * self.grid_size[1] * self.grid_size[2]
                < 2 ** 31), "packed int32 voxel key would overflow"
        # Coarsened pillar-block grid (removes the ~600-cycle/step overhead of a
        # one-pillar-per-step grid).
        self.pillar_block = min(128, _round_up(self.max_voxels, 8))
        self.max_voxels_pad = _round_up(self.max_voxels, self.pillar_block)

    # ---- stage 1: per-point packed voxel key (Pallas, elementwise / VPU) ----
    def _compute_keys(self, pts):
        n = pts.shape[0]
        rows_needed = max(1, -(-n // _LANES))
        block_rows = min(self._MAX_KEY_BLOCK_ROWS, _round_up(rows_needed, 8))
        rows = _round_up(rows_needed, block_rows)
        n_pad = rows * _LANES
        xyz = jnp.transpose(pts[:, :3])                        # (3, N)
        xyz = jnp.pad(xyz, ((0, 0), (0, n_pad - n)))
        xyz = xyz.reshape(3, rows, _LANES)                     # lane+sublane dense
        call = _build_voxel_key_call(rows, block_rows, self.pc_range[:3],
                                     self.voxel_size, self.grid_size)
        keys = call(xyz)
        return np.asarray(jax.device_get(keys)).reshape(-1)[:n]

    # ---- stage 2: FCFS dedup / slot assignment (host, vectorized numpy) ----
    def _assign_voxels(self, keys_np, sentinel):
        mnp = self.max_num_points
        idx_flat = np.full((self.max_voxels_pad * mnp,), sentinel, np.int32)
        valid_idx = np.flatnonzero(keys_np >= 0).astype(np.int32)
        if valid_idx.size == 0:
            return idx_flat, np.zeros((0, 3), np.int32), np.zeros((0,), np.int32)
        vkeys = keys_np[valid_idx]
        uniq, first_pos, inverse = np.unique(vkeys, return_index=True,
                                             return_inverse=True)
        inverse = inverse.reshape(-1)
        order = np.argsort(first_pos, kind="stable")        # appearance order
        rank = np.empty(order.size, np.int64)
        rank[order] = np.arange(order.size)
        vid = rank[inverse]                                  # FCFS voxel id / point
        counts = np.bincount(vid, minlength=order.size)
        sort_perm = np.argsort(vid, kind="stable")
        starts = np.zeros(order.size, np.int64)
        starts[1:] = np.cumsum(counts)[:-1]
        slot = np.empty(vid.size, np.int64)
        slot[sort_perm] = np.arange(vid.size) - starts[vid[sort_perm]]
        p = int(min(order.size, self.max_voxels))
        keep = (vid < self.max_voxels) & (slot < mnp)
        idx_flat[vid[keep] * mnp + slot[keep]] = valid_idx[keep]
        nx, ny, _ = self.grid_size
        kept = uniq[order[:p]].astype(np.int64)
        coors = np.stack([kept // (nx * ny), (kept // nx) % ny, kept % nx],
                         axis=1).astype(np.int32)            # (z, y, x)
        npoints = np.minimum(counts[:p], mnp).astype(np.int32)
        return idx_flat, coors, npoints

    # ---- stage 3: gather points into (pillar, slot, C) (Pallas) ----
    def _gather_pillars(self, pts, idx_flat):
        n, c = pts.shape
        n_pts_pad = _round_up(n + 1, self._PTS_PAD)  # >= n + 1 zero row (sentinel)
        pts_pad = jnp.pad(pts, ((0, n_pts_pad - n), (0, 0)))
        call = _build_pillar_gather_call(n_pts_pad, c, self.max_voxels_pad,
                                         self.max_num_points, self.pillar_block)
        flat = call(jnp.asarray(idx_flat), pts_pad)   # (mv_pad, mnp * C) lane-dense
        return flat.reshape(self.max_voxels_pad, self.max_num_points, c)

    def forward(self, batched_pts):
        pillars_list, coors_list, npoints_list = [], [], []
        for b, pts in enumerate(batched_pts):
            pts = jnp.asarray(pts, jnp.float32)
            n = pts.shape[0]
            keys_np = self._compute_keys(pts)
            sentinel = n  # first zero-padded row of pts_pad -> empty slot = zeros
            idx_flat, coors_np, npoints_np = self._assign_voxels(keys_np, sentinel)
            p = coors_np.shape[0]
            pillars_full = self._gather_pillars(pts, idx_flat)
            pillars_list.append(pillars_full[:p])
            # F.pad(coors, (1, 0), value=b): prepend batch index column
            cb = np.concatenate([np.full((p, 1), b, np.int32), coors_np], axis=1)
            coors_list.append(jnp.asarray(cb))
            npoints_list.append(jnp.asarray(npoints_np))

        pillars = jnp.concatenate(pillars_list, axis=0)
        coors_batch = jnp.concatenate(coors_list, axis=0)
        npoints_per_pillar = jnp.concatenate(npoints_list, axis=0)
        return pillars, coors_batch, npoints_per_pillar


# --------------------- straightforward reference (host) -----------------------


def _reference_voxelize(pts_np, keys_np, max_voxels, max_num_points):
    """Per-point FCFS loop with mmcv hard-voxelization semantics (for checking)."""
    c = pts_np.shape[1]
    key_to_vid = {}
    coors, npoints, pillar_rows = [], [], []
    for i, k in enumerate(keys_np):
        k = int(k)
        if k < 0:
            continue
        vid = key_to_vid.get(k, -1)
        if vid == -1:
            if len(coors) >= max_voxels:
                continue
            vid = len(coors)
            key_to_vid[k] = vid
            coors.append(k)
            npoints.append(0)
            pillar_rows.append(np.zeros((max_num_points, c), np.float32))
        if npoints[vid] < max_num_points:
            pillar_rows[vid][npoints[vid]] = pts_np[i]
            npoints[vid] += 1
    p = len(coors)
    pillars = (np.stack(pillar_rows, 0) if p
               else np.zeros((0, max_num_points, c), np.float32))
    return pillars, np.asarray(coors, np.int64), np.asarray(npoints, np.int32)


# ----------------------------------- main --------------------------------------


if __name__ == "__main__":
    # Small synthetic config: pillar grid = 8 x 10 x 1.
    voxel_size = (0.8, 0.8, 4.0)
    point_cloud_range = (0.0, -4.0, -3.0, 6.4, 4.0, 1.0)
    max_num_points = 8
    max_voxels = 16

    layer = PillarLayerPallas(voxel_size, point_cloud_range,
                              max_num_points, max_voxels)

    key = jax.random.PRNGKey(0)
    k1, k2 = jax.random.split(key)
    # Two point clouds (batch = 2); some points fall outside the range on purpose.
    pts0 = jax.random.uniform(
        k1, (64, 4), jnp.float32,
        minval=jnp.array([-1.0, -5.0, -4.0, 0.0]),
        maxval=jnp.array([7.5, 5.0, 2.0, 1.0]))
    pts1 = jax.random.uniform(
        k2, (48, 4), jnp.float32,
        minval=jnp.array([-1.0, -5.0, -4.0, 0.0]),
        maxval=jnp.array([7.5, 5.0, 2.0, 1.0]))
    batched_pts = [pts0, pts1]

    pillars, coors_batch, npoints_per_pillar = layer.forward(batched_pts)
    jax.block_until_ready((pillars, coors_batch, npoints_per_pillar))

    # ---- check against a straightforward per-point FCFS reference ----
    nx, ny, _ = layer.grid_size
    ref_pillars, ref_coors, ref_npoints = [], [], []
    for b, pts in enumerate(batched_pts):
        pts_np = np.asarray(jax.device_get(pts))
        keys_np = layer._compute_keys(pts)
        pr, kr, nr = _reference_voxelize(pts_np, keys_np,
                                         max_voxels, max_num_points)
        z = kr // (nx * ny)
        y = (kr // nx) % ny
        x = kr % nx
        cb = np.stack([np.full_like(z, b), z, y, x], axis=1).astype(np.int32)
        ref_pillars.append(pr)
        ref_coors.append(cb)
        ref_npoints.append(nr)
    ref_pillars = np.concatenate(ref_pillars, axis=0)
    ref_coors = np.concatenate(ref_coors, axis=0)
    ref_npoints = np.concatenate(ref_npoints, axis=0)

    got_pillars = np.asarray(jax.device_get(pillars))
    got_coors = np.asarray(jax.device_get(coors_batch))
    got_npoints = np.asarray(jax.device_get(npoints_per_pillar))

    P = ref_pillars.shape[0]
    assert got_pillars.shape == (P, max_num_points, 4)
    assert got_coors.shape == (P, 4)
    assert got_npoints.shape == (P,)
    assert np.array_equal(got_pillars, ref_pillars)
    assert np.array_equal(got_coors, ref_coors)
    assert np.array_equal(got_npoints, ref_npoints)

    print("KERNEL_OK")
</pallas_src>

<mosaic_0001>
module attributes {stable_mosaic.version = 11 : i64} {
  func.func @_voxel_key_kernel(%arg0: i32, %arg1: memref<3x8x128xf32, #tpu.memory_space<vmem>>, %arg2: memref<8x128xi32, #tpu.memory_space<vmem>>) attributes {dimension_semantics = [#tpu.dimension_semantics<parallel>], iteration_bounds = array<i64: 1>, scalar_prefetch = 0 : i64, scratch_operands = 0 : i64, tpu.core_type = #tpu.core_type<tc>, window_params = [{transform_indices = @transform_0, window_bounds = array<i64: 3, 8, 128>}, {transform_indices = @transform_1, window_bounds = array<i64: 8, 128>}]} {
    %c0 = arith.constant 0 : index
    %c0_0 = arith.constant 0 : index
    %c0_1 = arith.constant 0 : index
    %0 = vector.load %arg1[%c0, %c0_0, %c0_1] : memref<3x8x128xf32, #tpu.memory_space<vmem>>, vector<1x8x128xf32>
    %1 = vector.shape_cast %0 : vector<1x8x128xf32> to vector<8x128xf32>
    %cst = arith.constant 0.000000e+00 : f32
    %2 = vector.broadcast %cst : f32 to vector<8x128xf32>
    %3 = arith.subf %1, %2 : vector<8x128xf32>
    %cst_2 = arith.constant 8.000000e-01 : f32
    %4 = vector.broadcast %cst_2 : f32 to vector<8x128xf32>
    %5 = arith.divf %3, %4 : vector<8x128xf32>
    %6 = math.floor %5 : vector<8x128xf32>
    %c1 = arith.constant 1 : index
    %c0_3 = arith.constant 0 : index
    %c0_4 = arith.constant 0 : index
    %7 = vector.load %arg1[%c1, %c0_3, %c0_4] : memref<3x8x128xf32, #tpu.memory_space<vmem>>, vector<1x8x128xf32>
    %8 = vector.shape_cast %7 : vector<1x8x128xf32> to vector<8x128xf32>
    %cst_5 = arith.constant -4.000000e+00 : f32
    %9 = vector.broadcast %cst_5 : f32 to vector<8x128xf32>
    %10 = arith.subf %8, %9 : vector<8x128xf32>
    %cst_6 = arith.constant 8.000000e-01 : f32
    %11 = vector.broadcast %cst_6 : f32 to vector<8x128xf32>
    %12 = arith.divf %10, %11 : vector<8x128xf32>
    %13 = math.floor %12 : vector<8x128xf32>
    %c2 = arith.constant 2 : index
    %c0_7 = arith.constant 0 : index
    %c0_8 = arith.constant 0 : index
    %14 = vector.load %arg1[%c2, %c0_7, %c0_8] : memref<3x8x128xf32, #tpu.memory_space<vmem>>, vector<1x8x128xf32>
    %15 = vector.shape_cast %14 : vector<1x8x128xf32> to vector<8x128xf32>
    %cst_9 = arith.constant -3.000000e+00 : f32
    %16 = vector.broadcast %cst_9 : f32 to vector<8x128xf32>
    %17 = arith.subf %15, %16 : vector<8x128xf32>
    %cst_10 = arith.constant 4.000000e+00 : f32
    %18 = vector.broadcast %cst_10 : f32 to vector<8x128xf32>
    %19 = arith.divf %17, %18 : vector<8x128xf32>
    %20 = math.floor %19 : vector<8x128xf32>
    %cst_11 = arith.constant 0.000000e+00 : f32
    %21 = vector.broadcast %cst_11 : f32 to vector<8x128xf32>
    %22 = arith.cmpf oge, %6, %21 : vector<8x128xf32>
    %cst_12 = arith.constant 8.000000e+00 : f32
    %23 = vector.broadcast %cst_12 : f32 to vector<8x128xf32>
    %24 = arith.cmpf olt, %6, %23 : vector<8x128xf32>
    %25 = arith.andi %22, %24 : vector<8x128xi1>
    %cst_13 = arith.constant 0.000000e+00 : f32
    %26 = vector.broadcast %cst_13 : f32 to vector<8x128xf32>
    %27 = arith.cmpf oge, %13, %26 : vector<8x128xf32>
    %28 = arith.andi %25, %27 : vector<8x128xi1>
    %cst_14 = arith.constant 1.000000e+01 : f32
    %29 = vector.broadcast %cst_14 : f32 to vector<8x128xf32>
    %30 = arith.cmpf olt, %13, %29 : vector<8x128xf32>
    %31 = arith.andi %28, %30 : vector<8x128xi1>
    %cst_15 = arith.constant 0.000000e+00 : f32
    %32 = vector.broadcast %cst_15 : f32 to vector<8x128xf32>
    %33 = arith.cmpf oge, %20, %32 : vector<8x128xf32>
    %34 = arith.andi %31, %33 : vector<8x128xi1>
    %cst_16 = arith.constant 1.000000e+00 : f32
    %35 = vector.broadcast %cst_16 : f32 to vector<8x128xf32>
    %36 = arith.cmpf olt, %20, %35 : vector<8x128xf32>
    %37 = arith.andi %34, %36 : vector<8x128xi1>
    %38 = arith.fptosi %6 : vector<8x128xf32> to vector<8x128xi32>
    %39 = arith.fptosi %13 : vector<8x128xf32> to vector<8x128xi32>
    %40 = arith.fptosi %20 : vector<8x128xf32> to vector<8x128xi32>
    %c10_i32 = arith.constant 10 : i32
    %41 = vector.broadcast %c10_i32 : i32 to vector<8x128xi32>
    %42 = arith.muli %40, %41 : vector<8x128xi32>
    %43 = arith.addi %42, %39 : vector<8x128xi32>
    %c8_i32 = arith.constant 8 : i32
    %44 = vector.broadcast %c8_i32 : i32 to vector<8x128xi32>
    %45 = arith.muli %43, %44 : vector<8x128xi32>
    %46 = arith.addi %45, %38 : vector<8x128xi32>
    %c-1_i32 = arith.constant -1 : i32
    %47 = vector.broadcast %c-1_i32 : i32 to vector<8x128xi32>
    %48 = arith.select %37, %46, %47 : vector<8x128xi1>, vector<8x128xi32>
    %c0_17 = arith.constant 0 : index
    %c0_18 = arith.constant 0 : index
    %49 = vector.load %arg2[%c0_17, %c0_18] : memref<8x128xi32, #tpu.memory_space<vmem>>, vector<8x128xi32>
    tpu.vector_store %arg2[%c0_17, %c0_18], %48 {strides = array<i32>} : memref<8x128xi32, #tpu.memory_space<vmem>>, vector<8x128xi32>,
    return
  }
  func.func @transform_0(%arg0: i32) -> (i32, i32, i32) {
    %c0_i32 = arith.constant 0 : i32
    %c0_i32_0 = arith.constant 0 : i32
    %c0_i32_1 = arith.constant 0 : i32
    return %c0_i32, %arg0, %c0_i32_0 : i32, i32, i32
  }
  func.func @transform_1(%arg0: i32) -> (i32, i32) {
    %c0_i32 = arith.constant 0 : i32
    %c0_i32_0 = arith.constant 0 : i32
    return %arg0, %c0_i32 : i32, i32
  }
}

</mosaic_0001>

<llo_original>
// kernel: tpu_custom_call.1
$region0: #{tpu_custom_call.1}
  #allocation0 [shape = 'u32[]', space=smem, size = 0x4, offset = 0x4, fixed_abs, tag = 'smem constant byte address 0x4 - core index']
  #allocation1 [shape = 'u32[144,128]{1,0:T(1,128)}', space=vmem, size = 0x12000, scoped, tag = 'internal scratch']
  %s0 = inlined_call_operand.hbm [shape: f32[3,8,128], index: 0, kind: input, shape index: {}]
  %s1 = inlined_call_operand.hbm [shape: s32[8,128], index: 1, kind: output, shape index: {}]
  %s2 = sld [smem:[#allocation0]]
  $region18: #{tpu_custom_call.1} parent=0
    _
  %s4 = ssub.s32 1, %s2
  %s5 = scalar_select 0, %s4, %s2
  $region1: #{tpu_custom_call.1} parent=0
    #allocation2 [shape = 'u8[12288]{0}', space=vmem, size = 0x3000, scoped, tag = 'input window, operand 0, single buffered']
    #allocation3 [shape = 's32[1]{0}', space=sflag, size = 0x4, scoped, tag = 'scoped memory for tpu_custom_call.1']
    #allocation4 [shape = 's32[1]{0}', space=sflag, size = 0x4, scoped, tag = 'scoped memory for tpu_custom_call.1']
    #allocation5 [shape = 'u8[4096]{0}', space=vmem, size = 0x1000, scoped, tag = 'output window, operand 0, single buffered']
    %6 = vsyncpa [#allocation3], 0
    %7 = vsyncpa [#allocation4], 0
    // Predicated region
    $region2: #{tpu_custom_call.1} parent=1 // pred_check
      _
    $region3: #{tpu_custom_call.1} parent=1 // pred_check_branch
      %9 = sbr.rel (0) target = $region5
    $region4: #{tpu_custom_call.1} parent=1 // pred_region
      %s11 = ssub.s32 384, 384
      %12 = vsyncadd [#allocation3], %s11
      %s13 = sshll.u32 [#allocation2], 4
      %s14 = int_to_ptr.vmem [resolvable:$true] %s13
      %19 = dma.hbm_to_vmem [thread:$0]  %s0, 384, %s14, [#allocation3], 128, 128, 8
    $region5: #{tpu_custom_call.1} parent=1 // pred_fallthru
      _
    // Predicated region
    $region6: #{tpu_custom_call.1} parent=1 // pred_check
      _
    $region7: #{tpu_custom_call.1} parent=1 // pred_check_branch
      %21 = sbr.rel (0) target = $region9
    $region8: #{tpu_custom_call.1} parent=1 // pred_region
      %22 = dma.done [#allocation3], 384
    $region9: #{tpu_custom_call.1} parent=1 // pred_fallthru
      _
    %v23 = vld [vmem:[#allocation2] sm:$0xff]
    %v24 = vrcp.pop 0.8
    %v25 = vmul.f32 %v23, %v24
    %v26 = vfloor.f32 %v25
    %s27 = scalar_lea.vmem [#allocation2], 8
    %v28 = vld [vmem:[%s27] sm:$0xff]
    %v29 = vsub.f32 %v28, -4.0
    %v30 = vmul.f32 %v29, %v24
    %v31 = vfloor.f32 %v30
    %s32 = scalar_lea.vmem [#allocation2], 16
    %v33 = vld [vmem:[%s32] sm:$0xff]
    %v34 = vsub.f32 %v33, -3.0
    %v35 = vrcp.pop 4.0
    %v36 = vmul.f32 %v34, %v35
    %v37 = vfloor.f32 %v36
    %vm38 = vcmp.ge.f32.partialorder %v26, 0.0
    %vm39 = vcmp.lt.f32.partialorder %v26, 8.0
    %vm40 = vmand %vm38, %vm39
    %vm41 = vcmp.ge.f32.partialorder %v31, 0.0
    %vm42 = vmand %vm40, %vm41
    %vm43 = vcmp.lt.f32.partialorder %v31, 10.0
    %vm44 = vmand %vm42, %vm43
    %vm45 = vcmp.ge.f32.partialorder %v37, 0.0
    %vm46 = vmand %vm44, %vm45
    %vm47 = vcmp.lt.f32.partialorder %v37, 1.0
    %vm48 = vmand %vm46, %vm47
    %v49 = vcvt.f32.s32.to.zero.pseudo %v26
    %v50 = vcvt.f32.s32.to.zero.pseudo %v31
    %v51 = vcvt.f32.s32.to.zero.pseudo %v37
    %v52 = vmul.u32 %v51, 10
    %v53 = vadd.s32 %v52, %v50
    %v54 = vmul.u32 %v53, 8
    %v55 = vadd.s32 %v54, %v49
    %v56 = vsel %vm48, %v55, 4294967295
    %57 = vst [vmem:[#allocation5] sm:$0xff] %v56
    // Predicated region
    $region10: #{tpu_custom_call.1} parent=1 // pred_check
      _
    $region11: #{tpu_custom_call.1} parent=1 // pred_check_branch
      %59 = sbr.rel (0) target = $region13
    $region12: #{tpu_custom_call.1} parent=1 // pred_region
      %s61 = ssub.s32 128, 128
      %62 = vsyncadd [#allocation4], %s61
      %s64 = sshll.u32 [#allocation5], 4
      %s65 = int_to_ptr.vmem [resolvable:$true] %s64
      %67 = dma.vmem_to_hbm [thread:$0]  %s65, 128, %s1, [#allocation4]
    $region13: #{tpu_custom_call.1} parent=1 // pred_fallthru
      _
    // Predicated region
    $region14: #{tpu_custom_call.1} parent=1 // pred_check
      _
    $region15: #{tpu_custom_call.1} parent=1 // pred_check_branch
      %69 = sbr.rel (0) target = $region17
    $region16: #{tpu_custom_call.1} parent=1 // pred_region
      %70 = dma.done [#allocation4], 128
    $region17: #{tpu_custom_call.1} parent=1 // pred_fallthru
      _
    %71 = vsyncpa [#allocation3], 1
    %72 = vsyncpa [#allocation4], 1

</llo_original>
